<compile_context>
chip_gen: v6e
topology: v6e:2x2x1
jax: 0.10.0
libtpu: 0.0.40
codegen_flags: <defaults>
</compile_context>

<pallas_src>
import functools

import jax
import jax.numpy as jnp
from jax import lax
from jax.experimental import pallas as pl
from jax.experimental.pallas import tpu as pltpu


_VMEM_LIMIT = 32 * 1024 * 1024        # safe on v5e/v6e (128 MiB) and v7x (64 MiB phys)
_PASS1_VMEM_BUDGET = 24 * 1024 * 1024  # 2*tm*K*2 + K*Cout*2 + 2*tm*Cout*2 must fit here
_FUSED_BYTES_LIMIT = 6 * 1024 * 1024   # fused fast-path working-set ceiling


def _cdiv(a, b):
    return (a + b - 1) // b


def _round_up(a, b):
    return _cdiv(a, b) * b


# ----------------------------------------------------------------------------
# Fused fast path: O = relu(BN(X @ W)) in one kernel, grid=(1,)
#   Exact two-pass mean/variance in f32 (no one-pass cancellation issue).
# ----------------------------------------------------------------------------
def _fused_gemm_bn_relu_kernel(x_ref, w_ref, g_ref, b_ref, o_ref, *, eps):
    y = jnp.dot(x_ref[...], w_ref[...], preferred_element_type=jnp.float32)
    mean = jnp.mean(y, axis=0, keepdims=True)
    ctr = y - mean
    var = jnp.mean(ctr * ctr, axis=0, keepdims=True)
    scale = g_ref[...] * lax.rsqrt(var + eps)
    o_ref[...] = jnp.maximum(ctr * scale + b_ref[...], 0.0).astype(o_ref.dtype)


# ----------------------------------------------------------------------------
# Pass 1 (tiled path): Y = X @ W (bf16 operands, f32 accumulation, bf16 store)
#   + per-tile channel stats as two separate (1, Cout) outputs.
#   Zero-padded rows produce y == 0 -> contribute nothing to either sum.
# ----------------------------------------------------------------------------
def _gemm_stats_kernel(x_ref, w_ref, y_ref, s_ref, ss_ref):
    y = jnp.dot(x_ref[...], w_ref[...], preferred_element_type=jnp.float32)
    y_ref[...] = y.astype(y_ref.dtype)
    s_ref[...] = jnp.sum(y, axis=0, keepdims=True)
    ss_ref[...] = jnp.sum(y * y, axis=0, keepdims=True)


# ----------------------------------------------------------------------------
# Pass 2 (tiled path): O = relu(Y * scale + shift)   (BN folded into one FMA)
# ----------------------------------------------------------------------------
def _bn_relu_kernel(y_ref, scale_ref, shift_ref, o_ref):
    y = y_ref[...].astype(jnp.float32)
    o_ref[...] = jnp.maximum(y * scale_ref[...] + shift_ref[...], 0.0).astype(o_ref.dtype)


def gemm_bn_relu(x_bf16, w_bf16, gamma, beta, eps, *, out_dtype=jnp.float32,
                 tm_target=512, tm2_target=2048,
                 fused_bytes_limit=_FUSED_BYTES_LIMIT):
    """relu(batchnorm(x @ w)) with global batch statistics over the M axis."""
    M, K = x_bf16.shape
    Cout = w_bf16.shape[1]
    out_bytes = jnp.dtype(out_dtype).itemsize

    gamma = gamma.astype(jnp.float32).reshape(1, Cout)
    beta = beta.astype(jnp.float32).reshape(1, Cout)

    # ---- fused single-call fast path (no Y round trip through HBM) ----------
    fused_bytes = (M * K * 2 + K * Cout * 2              # X, W (bf16)
                   + M * Cout * (4 + 4 + out_bytes))     # y, centered copy, out
    if fused_bytes <= fused_bytes_limit:
        return pl.pallas_call(
            functools.partial(_fused_gemm_bn_relu_kernel, eps=eps),
            out_shape=jax.ShapeDtypeStruct((M, Cout), out_dtype),
            grid=(1,),
            in_specs=[pl.BlockSpec((M, K), lambda i: (0, 0)),
                      pl.BlockSpec((K, Cout), lambda i: (0, 0)),
                      pl.BlockSpec((1, Cout), lambda i: (0, 0)),
                      pl.BlockSpec((1, Cout), lambda i: (0, 0))],
            out_specs=pl.BlockSpec((M, Cout), lambda i: (0, 0)),
            compiler_params=pltpu.CompilerParams(vmem_limit_bytes=_VMEM_LIMIT),
        )(x_bf16, w_bf16, gamma, beta)

    # ---- tiled two-pass path -------------------------------------------------
    # Even tile count keeps both v7x TensorCores busy; tile rows are multiples of
    # 16 so bf16 vregs are fully packed.
    n_tiles = max(2, _cdiv(M, tm_target))
    if n_tiles % 2:
        n_tiles += 1
    tm = _round_up(_cdiv(M, n_tiles), 16)
    # VMEM formula check (double-buffered X + resident W + double-buffered bf16 Y).
    while (4 * tm * K + 2 * K * Cout + 4 * tm * Cout) > _PASS1_VMEM_BUDGET and tm > 16:
        n_tiles *= 2
        tm = _round_up(_cdiv(M, n_tiles), 16)
    m_pad = n_tiles * tm
    if m_pad != M:
        x_bf16 = jnp.pad(x_bf16, ((0, m_pad - M), (0, 0)))

    cparams = pltpu.CompilerParams(dimension_semantics=("parallel",),
                                   vmem_limit_bytes=_VMEM_LIMIT)

    # pass 1: tiled GEMM + per-tile partial stats (Y stored bf16)
    y, s_part, ss_part = pl.pallas_call(
        _gemm_stats_kernel,
        out_shape=(jax.ShapeDtypeStruct((m_pad, Cout), jnp.bfloat16),
                   jax.ShapeDtypeStruct((n_tiles, Cout), jnp.float32),
                   jax.ShapeDtypeStruct((n_tiles, Cout), jnp.float32)),
        grid=(n_tiles,),
        in_specs=[pl.BlockSpec((tm, K), lambda i: (i, 0)),
                  pl.BlockSpec((K, Cout), lambda i: (0, 0))],
        out_specs=(pl.BlockSpec((tm, Cout), lambda i: (i, 0)),
                   pl.BlockSpec((1, Cout), lambda i: (i, 0)),
                   pl.BlockSpec((1, Cout), lambda i: (i, 0))),
        compiler_params=cparams,
    )(x_bf16, w_bf16)

    # tiny glue: reduce partials (one-pass variance in f32; zero-pad rows add 0),
    # fold BN affine into a single per-channel scale/shift.
    mean = jnp.sum(s_part, axis=0, keepdims=True) / M
    var = jnp.maximum(jnp.sum(ss_part, axis=0, keepdims=True) / M - mean * mean, 0.0)
    scale = gamma * lax.rsqrt(var + eps)
    shift = beta - mean * scale

    # pass 2: streaming normalize + ReLU with a larger, decoupled tile.
    k = max(1, tm2_target // tm)
    while k > 1 and (n_tiles % k != 0 or n_tiles // k < 2):
        k -= 1
    tm2 = tm * k
    n2 = n_tiles // k

    out = pl.pallas_call(
        _bn_relu_kernel,
        out_shape=jax.ShapeDtypeStruct((m_pad, Cout), out_dtype),
        grid=(n2,),
        in_specs=[pl.BlockSpec((tm2, Cout), lambda i: (i, 0)),
                  pl.BlockSpec((1, Cout), lambda i: (0, 0)),
                  pl.BlockSpec((1, Cout), lambda i: (0, 0))],
        out_specs=pl.BlockSpec((tm2, Cout), lambda i: (i, 0)),
        compiler_params=cparams,
    )(y, scale, shift)

    return out[:M] if m_pad != M else out


# ----------------------------------------------------------------------------
# Glue: im2col for a 3x3 conv with stride 2, padding 1 (NHWC input), in bf16
# ----------------------------------------------------------------------------
def im2col_3x3_s2_p1(x_nhwc):
    N, H, W, C = x_nhwc.shape
    Ho = (H + 2 - 3) // 2 + 1
    Wo = (W + 2 - 3) // 2 + 1
    xp = jnp.pad(x_nhwc.astype(jnp.bfloat16), ((0, 0), (1, 1), (1, 1), (0, 0)))
    cols = []
    for ki in range(3):
        for kj in range(3):
            cols.append(xp[:, ki:ki + 2 * Ho - 1:2, kj:kj + 2 * Wo - 1:2, :])
    patches = jnp.concatenate(cols, axis=-1)          # [N, Ho, Wo, 9*C] bf16
    return patches.reshape(N * Ho * Wo, 9 * C), (N, Ho, Wo)


def conv_bn_relu_layer(x_nhwc, w_hwio, gamma, beta, eps, *, out_dtype=jnp.float32):
    """Conv2d(3x3, stride 2, pad 1, no bias) + BatchNorm2d + ReLU, NHWC in/out."""
    patches, (N, Ho, Wo) = im2col_3x3_s2_p1(x_nhwc)
    kh, kw, cin, cout = w_hwio.shape
    w_mat = w_hwio.reshape(kh * kw * cin, cout).astype(jnp.bfloat16)
    y = gemm_bn_relu(patches, w_mat, gamma, beta, eps, out_dtype=out_dtype)
    return y.reshape(N, Ho, Wo, cout)


# ----------------------------------------------------------------------------
# PatchEmbed forward: x (NCHW) -> Identity -> conv stack -> y (NCHW)
# ----------------------------------------------------------------------------
def patch_embed_forward(x_nchw, params):
    x = jnp.transpose(x_nchw, (0, 2, 3, 1))           # NCHW -> NHWC
    # Layer-1 activation emitted in bf16: layer-2's im2col consumes bf16 anyway.
    x = conv_bn_relu_layer(x, params["w1"], params["g1"], params["b1"], 1e-5,
                           out_dtype=jnp.bfloat16)
    x = conv_bn_relu_layer(x, params["w2"], params["g2"], params["b2"], 1e-4,
                           out_dtype=jnp.float32)
    return jnp.transpose(x, (0, 3, 1, 2))             # NHWC -> NCHW


# ----------------------------------------------------------------------------
# Pure-JAX reference (lax.conv with the same bf16 precision choices)
# ----------------------------------------------------------------------------
def _ref_layer(x_nhwc, w_hwio, gamma, beta, eps):
    y = lax.conv_general_dilated(
        x_nhwc.astype(jnp.bfloat16), w_hwio.astype(jnp.bfloat16),
        window_strides=(2, 2), padding=((1, 1), (1, 1)),
        dimension_numbers=("NHWC", "HWIO", "NHWC"),
        preferred_element_type=jnp.float32)
    mean = jnp.mean(y, axis=(0, 1, 2), keepdims=True)
    var = jnp.mean((y - mean) ** 2, axis=(0, 1, 2), keepdims=True)
    return jnp.maximum((y - mean) * lax.rsqrt(var + eps) * gamma + beta, 0.0)


def patch_embed_reference(x_nchw, params):
    x = jnp.transpose(x_nchw, (0, 2, 3, 1))
    # Mirror the kernel's deliberate bf16 inter-layer activation.
    x = _ref_layer(x, params["w1"], params["g1"], params["b1"], 1e-5).astype(jnp.bfloat16)
    x = _ref_layer(x, params["w2"], params["g2"], params["b2"], 1e-4)
    return jnp.transpose(x, (0, 3, 1, 2))


if __name__ == "__main__":
    in_chans, in_dim, dim = 32, 64, 128
    N, H, W = 2, 16, 16

    key = jax.random.PRNGKey(0)
    k_x, k_w1, k_w2, k_g1, k_b1, k_g2, k_b2, k_tx, k_tw = jax.random.split(key, 9)

    x = jax.random.normal(k_x, (N, in_chans, H, W), dtype=jnp.float32)

    # Deterministic parameter init (weights in HWIO layout, equivalent to
    # permuting PyTorch's [Cout, Cin, 3, 3] weights).
    params = {
        "w1": jax.random.normal(k_w1, (3, 3, in_chans, in_dim), jnp.float32)
              * (2.0 / (9 * in_chans)) ** 0.5,
        "g1": 1.0 + 0.1 * jax.random.normal(k_g1, (in_dim,), jnp.float32),
        "b1": 0.1 * jax.random.normal(k_b1, (in_dim,), jnp.float32),
        "w2": jax.random.normal(k_w2, (3, 3, in_dim, dim), jnp.float32)
              * (2.0 / (9 * in_dim)) ** 0.5,
        "g2": 1.0 + 0.1 * jax.random.normal(k_g2, (dim,), jnp.float32),
        "b2": 0.1 * jax.random.normal(k_b2, (dim,), jnp.float32),
    }

    out = jax.block_until_ready(jax.jit(patch_embed_forward)(x, params))
    assert out.shape == (N, dim, H // 4, W // 4), out.shape

    ref = jax.block_until_ready(patch_embed_reference(x, params))
    max_err = float(jnp.max(jnp.abs(out - ref)))
    assert jnp.allclose(out, ref, rtol=1e-2, atol=1e-2), max_err

    # Also exercise the tiled two-pass path (bf16 Y intermediate) at a larger M.
    Mt, Kt, Ct = 1536, 256, 128
    xt = jax.random.normal(k_tx, (Mt, Kt), jnp.float32).astype(jnp.bfloat16)
    wt = (jax.random.normal(k_tw, (Kt, Ct), jnp.float32) / (Kt ** 0.5)).astype(jnp.bfloat16)
    gt = jnp.ones((Ct,), jnp.float32)
    bt = jnp.zeros((Ct,), jnp.float32)
    tiled = jax.block_until_ready(
        jax.jit(functools.partial(gemm_bn_relu, eps=1e-5, fused_bytes_limit=0))(
            xt, wt, gt, bt))
    y_ref = jnp.dot(xt, wt, preferred_element_type=jnp.float32)
    m_r = jnp.mean(y_ref, axis=0, keepdims=True)
    v_r = jnp.mean((y_ref - m_r) ** 2, axis=0, keepdims=True)
    ref_t = jnp.maximum((y_ref - m_r) * lax.rsqrt(v_r + 1e-5) * gt + bt, 0.0)
    t_err = float(jnp.max(jnp.abs(tiled - ref_t)))
    # Looser tolerance: the tiled path deliberately stores Y in bf16.
    assert jnp.allclose(tiled, ref_t, rtol=5e-2, atol=5e-2), t_err

    print("KERNEL_OK")
</pallas_src>

<mosaic_0001>
module attributes {stable_mosaic.version = 11 : i64} {
  func.func @_fused_gemm_bn_relu_kernel(%arg0: i32, %arg1: memref<128x288xbf16, #tpu.memory_space<vmem>>, %arg2: memref<288x64xbf16, #tpu.memory_space<vmem>>, %arg3: memref<1x64xf32, #tpu.memory_space<vmem>>, %arg4: memref<1x64xf32, #tpu.memory_space<vmem>>, %arg5: memref<128x64xbf16, #tpu.memory_space<vmem>>) attributes {dimension_semantics = [#tpu.dimension_semantics<arbitrary>], iteration_bounds = array<i64: 1>, scalar_prefetch = 0 : i64, scratch_operands = 0 : i64, tpu.core_type = #tpu.core_type<tc>, window_params = [{pipeline_mode = #tpu.pipeline_mode<synchronous>, transform_indices = @transform_0, window_bounds = array<i64: 128, 288>}, {pipeline_mode = #tpu.pipeline_mode<synchronous>, transform_indices = @transform_1, window_bounds = array<i64: 288, 64>}, {pipeline_mode = #tpu.pipeline_mode<synchronous>, transform_indices = @transform_2, window_bounds = array<i64: 1, 64>}, {pipeline_mode = #tpu.pipeline_mode<synchronous>, transform_indices = @transform_3, window_bounds = array<i64: 1, 64>}, {pipeline_mode = #tpu.pipeline_mode<synchronous>, transform_indices = @transform_4, window_bounds = array<i64: 128, 64>}]} {
    %c0 = arith.constant 0 : index
    %c0_0 = arith.constant 0 : index
    %0 = vector.load %arg1[%c0, %c0_0] : memref<128x288xbf16, #tpu.memory_space<vmem>>, vector<128x288xbf16>
    %c0_1 = arith.constant 0 : index
    %c0_2 = arith.constant 0 : index
    %1 = vector.load %arg2[%c0_1, %c0_2] : memref<288x64xbf16, #tpu.memory_space<vmem>>, vector<288x64xbf16>
    %cst = arith.constant dense<0.000000e+00> : vector<128x64xf32>
    %2 = tpu.matmul %0, %1, %cst {dimension_numbers = #tpu.dot_dimension_numbers<[1], [0], [0], [1], [0, 0, 1, 1], [], []>} : vector<128x288xbf16>, vector<288x64xbf16>, vector<128x64xf32> -> vector<128x64xf32>
    %cst_3 = arith.constant dense<0.000000e+00> : vector<64xf32>
    %3 = vector.multi_reduction <add>, %2, %cst_3 [0] : vector<128x64xf32> to vector<64xf32>
    %4 = vector.shape_cast %3 : vector<64xf32> to vector<1x64xf32>
    %cst_4 = arith.constant 1.280000e+02 : f32
    %5 = vector.broadcast %cst_4 : f32 to vector<1x64xf32>
    %6 = arith.divf %4, %5 : vector<1x64xf32>
    %7 = vector.broadcast %6 : vector<1x64xf32> to vector<128x64xf32>
    %8 = arith.subf %2, %7 : vector<128x64xf32>
    %9 = arith.mulf %8, %8 : vector<128x64xf32>
    %cst_5 = arith.constant dense<0.000000e+00> : vector<64xf32>
    %10 = vector.multi_reduction <add>, %9, %cst_5 [0] : vector<128x64xf32> to vector<64xf32>
    %11 = vector.shape_cast %10 : vector<64xf32> to vector<1x64xf32>
    %cst_6 = arith.constant 1.280000e+02 : f32
    %12 = vector.broadcast %cst_6 : f32 to vector<1x64xf32>
    %13 = arith.divf %11, %12 : vector<1x64xf32>
    %c0_7 = arith.constant 0 : index
    %c0_8 = arith.constant 0 : index
    %14 = vector.load %arg3[%c0_7, %c0_8] : memref<1x64xf32, #tpu.memory_space<vmem>>, vector<1x64xf32>
    %cst_9 = arith.constant 9.99999974E-6 : f32
    %15 = vector.broadcast %cst_9 : f32 to vector<1x64xf32>
    %16 = arith.addf %13, %15 : vector<1x64xf32>
    %17 = math.rsqrt %16 : vector<1x64xf32>
    %18 = arith.mulf %14, %17 : vector<1x64xf32>
    %19 = vector.broadcast %18 : vector<1x64xf32> to vector<128x64xf32>
    %20 = arith.mulf %8, %19 : vector<128x64xf32>
    %c0_10 = arith.constant 0 : index
    %c0_11 = arith.constant 0 : index
    %21 = vector.load %arg4[%c0_10, %c0_11] : memref<1x64xf32, #tpu.memory_space<vmem>>, vector<1x64xf32>
    %22 = vector.broadcast %21 : vector<1x64xf32> to vector<128x64xf32>
    %23 = arith.addf %20, %22 : vector<128x64xf32>
    %cst_12 = arith.constant 0.000000e+00 : f32
    %24 = vector.broadcast %cst_12 : f32 to vector<128x64xf32>
    %25 = arith.maximumf %23, %24 : vector<128x64xf32>
    %26 = arith.truncf %25 : vector<128x64xf32> to vector<128x64xbf16>
    %c0_13 = arith.constant 0 : index
    %c0_14 = arith.constant 0 : index
    %27 = vector.load %arg5[%c0_13, %c0_14] : memref<128x64xbf16, #tpu.memory_space<vmem>>, vector<128x64xbf16>
    tpu.vector_store %arg5[%c0_13, %c0_14], %26 {strides = array<i32>} : memref<128x64xbf16, #tpu.memory_space<vmem>>, vector<128x64xbf16>,
    return
  }
  func.func @transform_0(%arg0: i32) -> (i32, i32) {
    %c0_i32 = arith.constant 0 : i32
    %c0_i32_0 = arith.constant 0 : i32
    %c0_i32_1 = arith.constant 0 : i32
    return %c0_i32, %c0_i32_0 : i32, i32
  }
  func.func @transform_1(%arg0: i32) -> (i32, i32) {
    %c0_i32 = arith.constant 0 : i32
    %c0_i32_0 = arith.constant 0 : i32
    %c0_i32_1 = arith.constant 0 : i32
    return %c0_i32, %c0_i32_0 : i32, i32
  }
  func.func @transform_2(%arg0: i32) -> (i32, i32) {
    %c0_i32 = arith.constant 0 : i32
    %c0_i32_0 = arith.constant 0 : i32
    %c0_i32_1 = arith.constant 0 : i32
    return %c0_i32, %c0_i32_0 : i32, i32
  }
  func.func @transform_3(%arg0: i32) -> (i32, i32) {
    %c0_i32 = arith.constant 0 : i32
    %c0_i32_0 = arith.constant 0 : i32
    %c0_i32_1 = arith.constant 0 : i32
    return %c0_i32, %c0_i32_0 : i32, i32
  }
  func.func @transform_4(%arg0: i32) -> (i32, i32) {
    %c0_i32 = arith.constant 0 : i32
    %c0_i32_0 = arith.constant 0 : i32
    %c0_i32_1 = arith.constant 0 : i32
    return %c0_i32, %c0_i32_0 : i32, i32
  }
}

module attributes {stable_mosaic.version = 11 : i64} {
  func.func @_fused_gemm_bn_relu_kernel(%arg0: i32, %arg1: memref<32x576xbf16, #tpu.memory_space<vmem>>, %arg2: memref<576x128xbf16, #tpu.memory_space<vmem>>, %arg3: memref<1x128xf32, #tpu.memory_space<vmem>>, %arg4: memref<1x128xf32, #tpu.memory_space<vmem>>, %arg5: memref<32x128xf32, #tpu.memory_space<vmem>>) attributes {dimension_semantics = [#tpu.dimension_semantics<arbitrary>], iteration_bounds = array<i64: 1>, scalar_prefetch = 0 : i64, scratch_operands = 0 : i64, tpu.core_type = #tpu.core_type<tc>, window_params = [{pipeline_mode = #tpu.pipeline_mode<synchronous>, transform_indices = @transform_0, window_bounds = array<i64: 32, 576>}, {pipeline_mode = #tpu.pipeline_mode<synchronous>, transform_indices = @transform_1, window_bounds = array<i64: 576, 128>}, {pipeline_mode = #tpu.pipeline_mode<synchronous>, transform_indices = @transform_2, window_bounds = array<i64: 1, 128>}, {pipeline_mode = #tpu.pipeline_mode<synchronous>, transform_indices = @transform_3, window_bounds = array<i64: 1, 128>}, {pipeline_mode = #tpu.pipeline_mode<synchronous>, transform_indices = @transform_4, window_bounds = array<i64: 32, 128>}]} {
    %c0 = arith.constant 0 : index
    %c0_0 = arith.constant 0 : index
    %0 = vector.load %arg1[%c0, %c0_0] : memref<32x576xbf16, #tpu.memory_space<vmem>>, vector<32x576xbf16>
    %c0_1 = arith.constant 0 : index
    %c0_2 = arith.constant 0 : index
    %1 = vector.load %arg2[%c0_1, %c0_2] : memref<576x128xbf16, #tpu.memory_space<vmem>>, vector<576x128xbf16>
    %cst = arith.constant dense<0.000000e+00> : vector<32x128xf32>
    %2 = tpu.matmul %0, %1, %cst {dimension_numbers = #tpu.dot_dimension_numbers<[1], [0], [0], [1], [0, 0, 1, 1], [], []>} : vector<32x576xbf16>, vector<576x128xbf16>, vector<32x128xf32> -> vector<32x128xf32>
    %cst_3 = arith.constant dense<0.000000e+00> : vector<128xf32>
    %3 = vector.multi_reduction <add>, %2, %cst_3 [0] : vector<32x128xf32> to vector<128xf32>
    %4 = vector.shape_cast %3 : vector<128xf32> to vector<1x128xf32>
    %cst_4 = arith.constant 3.200000e+01 : f32
    %5 = vector.broadcast %cst_4 : f32 to vector<1x128xf32>
    %6 = arith.divf %4, %5 : vector<1x128xf32>
    %7 = vector.broadcast %6 : vector<1x128xf32> to vector<32x128xf32>
    %8 = arith.subf %2, %7 : vector<32x128xf32>
    %9 = arith.mulf %8, %8 : vector<32x128xf32>
    %cst_5 = arith.constant dense<0.000000e+00> : vector<128xf32>
    %10 = vector.multi_reduction <add>, %9, %cst_5 [0] : vector<32x128xf32> to vector<128xf32>
    %11 = vector.shape_cast %10 : vector<128xf32> to vector<1x128xf32>
    %cst_6 = arith.constant 3.200000e+01 : f32
    %12 = vector.broadcast %cst_6 : f32 to vector<1x128xf32>
    %13 = arith.divf %11, %12 : vector<1x128xf32>
    %c0_7 = arith.constant 0 : index
    %c0_8 = arith.constant 0 : index
    %14 = vector.load %arg3[%c0_7, %c0_8] : memref<1x128xf32, #tpu.memory_space<vmem>>, vector<1x128xf32>
    %cst_9 = arith.constant 9.99999974E-5 : f32
    %15 = vector.broadcast %cst_9 : f32 to vector<1x128xf32>
    %16 = arith.addf %13, %15 : vector<1x128xf32>
    %17 = math.rsqrt %16 : vector<1x128xf32>
    %18 = arith.mulf %14, %17 : vector<1x128xf32>
    %19 = vector.broadcast %18 : vector<1x128xf32> to vector<32x128xf32>
    %20 = arith.mulf %8, %19 : vector<32x128xf32>
    %c0_10 = arith.constant 0 : index
    %c0_11 = arith.constant 0 : index
    %21 = vector.load %arg4[%c0_10, %c0_11] : memref<1x128xf32, #tpu.memory_space<vmem>>, vector<1x128xf32>
    %22 = vector.broadcast %21 : vector<1x128xf32> to vector<32x128xf32>
    %23 = arith.addf %20, %22 : vector<32x128xf32>
    %cst_12 = arith.constant 0.000000e+00 : f32
    %24 = vector.broadcast %cst_12 : f32 to vector<32x128xf32>
    %25 = arith.maximumf %23, %24 : vector<32x128xf32>
    %c0_13 = arith.constant 0 : index
    %c0_14 = arith.constant 0 : index
    %26 = vector.load %arg5[%c0_13, %c0_14] : memref<32x128xf32, #tpu.memory_space<vmem>>, vector<32x128xf32>
    tpu.vector_store %arg5[%c0_13, %c0_14], %25 {strides = array<i32>} : memref<32x128xf32, #tpu.memory_space<vmem>>, vector<32x128xf32>,
    return
  }
  func.func @transform_0(%arg0: i32) -> (i32, i32) {
    %c0_i32 = arith.constant 0 : i32
    %c0_i32_0 = arith.constant 0 : i32
    %c0_i32_1 = arith.constant 0 : i32
    return %c0_i32, %c0_i32_0 : i32, i32
  }
  func.func @transform_1(%arg0: i32) -> (i32, i32) {
    %c0_i32 = arith.constant 0 : i32
    %c0_i32_0 = arith.constant 0 : i32
    %c0_i32_1 = arith.constant 0 : i32
    return %c0_i32, %c0_i32_0 : i32, i32
  }
  func.func @transform_2(%arg0: i32) -> (i32, i32) {
    %c0_i32 = arith.constant 0 : i32
    %c0_i32_0 = arith.constant 0 : i32
    %c0_i32_1 = arith.constant 0 : i32
    return %c0_i32, %c0_i32_0 : i32, i32
  }
  func.func @transform_3(%arg0: i32) -> (i32, i32) {
    %c0_i32 = arith.constant 0 : i32
    %c0_i32_0 = arith.constant 0 : i32
    %c0_i32_1 = arith.constant 0 : i32
    return %c0_i32, %c0_i32_0 : i32, i32
  }
  func.func @transform_4(%arg0: i32) -> (i32, i32) {
    %c0_i32 = arith.constant 0 : i32
    %c0_i32_0 = arith.constant 0 : i32
    %c0_i32_1 = arith.constant 0 : i32
    return %c0_i32, %c0_i32_0 : i32, i32
  }
}

</mosaic_0001>

<llo_original>
// kernel: patch_embed_forward.2
$region0: #{patch_embed_forward.2}
  #allocation0 [shape = 'u32[]', space=smem, size = 0x4, offset = 0x4, fixed_abs, tag = 'smem constant byte address 0x4 - core index']
  #allocation1 [shape = 'u32[144,128]{1,0:T(1,128)}', space=vmem, size = 0x12000, scoped, tag = 'internal scratch']
  %s0 = inlined_call_operand.vmem [shape: bf16[128,288], index: 0, kind: input, shape index: {}]
  %s1 = inlined_call_operand.vmem [shape: bf16[288,64], index: 1, kind: input, shape index: {}]
  %s2 = inlined_call_operand.vmem [shape: f32[1,64], index: 2, kind: input, shape index: {}]
  %s3 = inlined_call_operand.vmem [shape: f32[1,64], index: 3, kind: input, shape index: {}]
  %s4 = inlined_call_operand.vmem [shape: bf16[128,64], index: 4, kind: output, shape index: {}]
  %s5 = sld [smem:[#allocation0]]
  $region26: #{patch_embed_forward.2} parent=0
    _
  %s7 = ssub.s32 1, %s5
  %s8 = scalar_select 0, %s7, %s5
  // Predicated region
  $region2: #{patch_embed_forward.2} parent=0 // pred_check
    _
  $region3: #{patch_embed_forward.2} parent=0 // pred_check_branch
    %10 = sbr.rel (0) target = $region5
  $region4: #{patch_embed_forward.2} parent=0 // pred_region
    _
  $region5: #{patch_embed_forward.2} parent=0 // pred_fallthru
    _
  // Predicated region
  $region6: #{patch_embed_forward.2} parent=0 // pred_check
    _
  $region7: #{patch_embed_forward.2} parent=0 // pred_check_branch
    %12 = sbr.rel (0) target = $region9
  $region8: #{patch_embed_forward.2} parent=0 // pred_region
    _
  $region9: #{patch_embed_forward.2} parent=0 // pred_fallthru
    _
  // Predicated region
  $region10: #{patch_embed_forward.2} parent=0 // pred_check
    _
  $region11: #{patch_embed_forward.2} parent=0 // pred_check_branch
    %14 = sbr.rel (0) target = $region13
  $region12: #{patch_embed_forward.2} parent=0 // pred_region
    _
  $region13: #{patch_embed_forward.2} parent=0 // pred_fallthru
    _
  // Predicated region
  $region14: #{patch_embed_forward.2} parent=0 // pred_check
    _
  $region15: #{patch_embed_forward.2} parent=0 // pred_check_branch
    %16 = sbr.rel (0) target = $region17
  $region16: #{patch_embed_forward.2} parent=0 // pred_region
    _
  $region17: #{patch_embed_forward.2} parent=0 // pred_fallthru
    _
  %v18 = vld [vmem:[%s0] sm:$0xff]
  %v19 = vld [vmem:[%s0 + $0x8] sm:$0xf]
  %v20 = vld [vmem:[%s0 + $0xc] sm:$0xff]
  %v21 = vld [vmem:[%s0 + $0x14] sm:$0xf]
  %v22 = vld [vmem:[%s0 + $0x18] sm:$0xff]
  %v23 = vld [vmem:[%s0 + $0x20] sm:$0xf]
  %v24 = vld [vmem:[%s0 + $0x24] sm:$0xff]
  %v25 = vld [vmem:[%s0 + $0x2c] sm:$0xf]
  %v26 = vld [vmem:[%s0 + $0x30] sm:$0xff]
  %v27 = vld [vmem:[%s0 + $0x38] sm:$0xf]
  %v28 = vld [vmem:[%s0 + $0x3c] sm:$0xff]
  %v29 = vld [vmem:[%s0 + $0x44] sm:$0xf]
  %v30 = vld [vmem:[%s0 + $0x48] sm:$0xff]
  %v31 = vld [vmem:[%s0 + $0x50] sm:$0xf]
  %v32 = vld [vmem:[%s0 + $0x54] sm:$0xff]
  %v33 = vld [vmem:[%s0 + $0x5c] sm:$0xf]
  %v34 = vld [vmem:[%s0 + $0x60] sm:$0xff]
  %v35 = vld [vmem:[%s0 + $0x68] sm:$0xf]
  %v36 = vld [vmem:[%s0 + $0x6c] sm:$0xff]
  %v37 = vld [vmem:[%s0 + $0x74] sm:$0xf]
  %v38 = vld [vmem:[%s0 + $0x78] sm:$0xff]
  %v39 = vld [vmem:[%s0 + $0x80] sm:$0xf]
  %v40 = vld [vmem:[%s0 + $0x84] sm:$0xff]
  %v41 = vld [vmem:[%s0 + $0x8c] sm:$0xf]
  %v42 = vld [vmem:[%s0 + $0x90] sm:$0xff]
  %v43 = vld [vmem:[%s0 + $0x98] sm:$0xf]
  %v44 = vld [vmem:[%s0 + $0x9c] sm:$0xff]
  %v45 = vld [vmem:[%s0 + $0xa4] sm:$0xf]
  %v46 = vld [vmem:[%s0 + $0xa8] sm:$0xff]
  %v47 = vld [vmem:[%s0 + $0xb0] sm:$0xf]
  %v48 = vld [vmem:[%s0 + $0xb4] sm:$0xff]
  %v49 = vld [vmem:[%s0 + $0xbc] sm:$0xf]
  %v50 = vld [vmem:[%s1] sm:$0xf]
  %v51 = vld [vmem:[%s1 + $0x4] sm:$0xf]
  %v52 = vld [vmem:[%s1 + $0x8] sm:$0xf]
  %v53 = vld [vmem:[%s1 + $0xc] sm:$0xf]
  %v54 = vld [vmem:[%s1 + $0x10] sm:$0xf]
  %v55 = vld [vmem:[%s1 + $0x14] sm:$0xf]
  %v56 = vld [vmem:[%s1 + $0x18] sm:$0xf]
  %v57 = vld [vmem:[%s1 + $0x1c] sm:$0xf]
  %v58 = vld [vmem:[%s1 + $0x20] sm:$0xf]
  %v59 = vld [vmem:[%s1 + $0x24] sm:$0xf]
  %v60 = vld [vmem:[%s1 + $0x28] sm:$0xf]
  %v61 = vld [vmem:[%s1 + $0x2c] sm:$0xf]
  %v62 = vld [vmem:[%s1 + $0x30] sm:$0xf]
  %v63 = vld [vmem:[%s1 + $0x34] sm:$0xf]
  %v64 = vld [vmem:[%s1 + $0x38] sm:$0xf]
  %v65 = vld [vmem:[%s1 + $0x3c] sm:$0xf]
  %v66 = vld [vmem:[%s1 + $0x40] sm:$0xf]
  %v67 = vld [vmem:[%s1 + $0x44] sm:$0xf]
  %v68 = vld [vmem:[%s1 + $0x48] sm:$0xf]
  %v69 = vld [vmem:[%s1 + $0x4c] sm:$0xf]
  %v70 = vld [vmem:[%s1 + $0x50] sm:$0xf]
  %v71 = vld [vmem:[%s1 + $0x54] sm:$0xf]
  %v72 = vld [vmem:[%s1 + $0x58] sm:$0xf]
  %v73 = vld [vmem:[%s1 + $0x5c] sm:$0xf]
  %v74 = vld [vmem:[%s1 + $0x60] sm:$0xf]
  %v75 = vld [vmem:[%s1 + $0x64] sm:$0xf]
  %v76 = vld [vmem:[%s1 + $0x68] sm:$0xf]
  %v77 = vld [vmem:[%s1 + $0x6c] sm:$0xf]
  %v78 = vld [vmem:[%s1 + $0x70] sm:$0xf]
  %v79 = vld [vmem:[%s1 + $0x74] sm:$0xf]
  %v80 = vld [vmem:[%s1 + $0x78] sm:$0xf]
  %v81 = vld [vmem:[%s1 + $0x7c] sm:$0xf]
  %v82 = vld [vmem:[%s1 + $0x80] sm:$0xf]
  %v83 = vld [vmem:[%s1 + $0x84] sm:$0xf]
  %v84 = vld [vmem:[%s1 + $0x88] sm:$0xf]
  %v85 = vld [vmem:[%s1 + $0x8c] sm:$0xf]
  %v118 = vunpack.c.l.b16 %v18
  %v119 = vunpack.c.h.b16 %v18
  %v120 = vunpack.c.l.b16 %v19
  %v121 = vunpack.c.l.b16 %v20
  %v122 = vunpack.c.h.b16 %v20
  %v123 = vunpack.c.l.b16 %v21
  %v124 = vunpack.c.l.b16 %v22
  %v125 = vunpack.c.h.b16 %v22
  %v126 = vunpack.c.l.b16 %v23
  %v127 = vunpack.c.l.b16 %v24
  %v128 = vunpack.c.h.b16 %v24
  %v129 = vunpack.c.l.b16 %v25
  %v130 = vunpack.c.l.b16 %v26
  %v131 = vunpack.c.h.b16 %v26
  %v132 = vunpack.c.l.b16 %v27
  %v133 = vunpack.c.l.b16 %v28
  %v134 = vunpack.c.h.b16 %v28
  %v135 = vunpack.c.l.b16 %v29
  %v136 = vunpack.c.l.b16 %v30
  %v137 = vunpack.c.h.b16 %v30
  %v138 = vunpack.c.l.b16 %v31
  %v139 = vunpack.c.l.b16 %v32
  %v140 = vunpack.c.h.b16 %v32
  %v141 = vunpack.c.l.b16 %v33
  %v142 = vunpack.c.l.b16 %v34
  %v143 = vunpack.c.h.b16 %v34
  %v144 = vunpack.c.l.b16 %v35
  %v145 = vunpack.c.l.b16 %v36
  %v146 = vunpack.c.h.b16 %v36
  %v147 = vunpack.c.l.b16 %v37
  %v148 = vunpack.c.l.b16 %v38
  %v149 = vunpack.c.h.b16 %v38
  %v150 = vunpack.c.l.b16 %v39
  %v151 = vunpack.c.l.b16 %v40
  %v152 = vunpack.c.h.b16 %v40
  %v153 = vunpack.c.l.b16 %v41
  %v154 = vunpack.c.l.b16 %v42
  %v155 = vunpack.c.h.b16 %v42
  %v156 = vunpack.c.l.b16 %v43
  %v157 = vunpack.c.l.b16 %v44
  %v158 = vunpack.c.h.b16 %v44
  %v159 = vunpack.c.l.b16 %v45
  %v160 = vunpack.c.l.b16 %v46
  %v161 = vunpack.c.h.b16 %v46
  %v162 = vunpack.c.l.b16 %v47
  %v163 = vunpack.c.l.b16 %v48
  %v164 = vunpack.c.h.b16 %v48
  %v165 = vunpack.c.l.b16 %v49
  %v166 = vpack.c.b16 %v121, %v118
  %v167 = vpack.c.b16 %v122, %v119
  %v168 = vpack.c.b16 %v123, %v120
  %v169 = vpack.c.b16 %v127, %v124
  %v170 = vpack.c.b16 %v128, %v125
  %v171 = vpack.c.b16 %v129, %v126
  %v172 = vpack.c.b16 %v133, %v130
  %v173 = vpack.c.b16 %v134, %v131
  %v174 = vpack.c.b16 %v135, %v132
  %v175 = vpack.c.b16 %v139, %v136
  %v176 = vpack.c.b16 %v140, %v137
  %v177 = vpack.c.b16 %v141, %v138
  %v178 = vpack.c.b16 %v145, %v142
  %v179 = vpack.c.b16 %v146, %v143
  %v180 = vpack.c.b16 %v147, %v144
  %v181 = vpack.c.b16 %v151, %v148
  %v182 = vpack.c.b16 %v152, %v149
  %v183 = vpack.c.b16 %v153, %v150
  %v184 = vpack.c.b16 %v157, %v154
  %v185 = vpack.c.b16 %v158, %v155
  %v186 = vpack.c.b16 %v159, %v156
  %v187 = vpack.c.b16 %v163, %v160
  %v188 = vpack.c.b16 %v164, %v161
  %v189 = vpack.c.b16 %v165, %v162
  %v242 = vunpack.c.l.b16 %v50
  %v243 = vunpack.c.l.b16 %v51
  %v244 = vunpack.c.l.b16 %v52
  %v245 = vunpack.c.l.b16 %v53
  %v246 = vunpack.c.l.b16 %v54
  %v247 = vunpack.c.l.b16 %v55
  %v248 = vunpack.c.l.b16 %v56
  %v249 = vunpack.c.l.b16 %v57
  %v250 = vunpack.c.l.b16 %v58
  %v251 = vunpack.c.l.b16 %v59
  %v252 = vunpack.c.l.b16 %v60
  %v253 = vunpack.c.l.b16 %v61
  %v254 = vunpack.c.l.b16 %v62
  %v255 = vunpack.c.l.b16 %v63
  %v256 = vunpack.c.l.b16 %v64
  %v257 = vunpack.c.l.b16 %v65
  %v258 = vunpack.c.l.b16 %v66
  %v259 = vunpack.c.l.b16 %v67
  %v260 = vunpack.c.l.b16 %v68
  %v261 = vunpack.c.l.b16 %v69
  %v262 = vunpack.c.l.b16 %v70
  %v263 = vunpack.c.l.b16 %v71
  %v264 = vunpack.c.l.b16 %v72
  %v265 = vunpack.c.l.b16 %v73
  %v266 = vunpack.c.l.b16 %v74
  %v267 = vunpack.c.l.b16 %v75
  %v268 = vunpack.c.l.b16 %v76
  %v269 = vunpack.c.l.b16 %v77
  %v270 = vunpack.c.l.b16 %v78
  %v271 = vunpack.c.l.b16 %v79
  %v272 = vunpack.c.l.b16 %v80
  %v273 = vunpack.c.l.b16 %v81
  %v274 = vunpack.c.l.b16 %v82
  %v275 = vunpack.c.l.b16 %v83
  %v276 = vunpack.c.l.b16 %v84
  %v277 = vunpack.c.l.b16 %v85
  %v278 = vpack.c.b16 %v243, %v242
  %v279 = vpack.c.b16 %v245, %v244
  %v280 = vpack.c.b16 %v247, %v246
  %v281 = vpack.c.b16 %v249, %v248
  %v282 = vpack.c.b16 %v251, %v250
  %v283 = vpack.c.b16 %v253, %v252
  %v284 = vpack.c.b16 %v255, %v254
  %v285 = vpack.c.b16 %v257, %v256
  %v286 = vpack.c.b16 %v259, %v258
  %v287 = vpack.c.b16 %v261, %v260
  %v288 = vpack.c.b16 %v263, %v262
  %v289 = vpack.c.b16 %v265, %v264
  %v290 = vpack.c.b16 %v267, %v266
  %v291 = vpack.c.b16 %v269, %v268
  %v292 = vpack.c.b16 %v271, %v270
  %v293 = vpack.c.b16 %v273, %v272
  %v294 = vpack.c.b16 %v275, %v274
  %v295 = vpack.c.b16 %v277, %v276
  %vm314 = vcmask 261120
  %v316 = vsel %vm314, %v168, 0
  %v319 = vsel %vm314, %v171, 0
  %v322 = vsel %vm314, %v174, 0
  %v325 = vsel %vm314, %v177, 0
  %v328 = vsel %vm314, %v180, 0
  %v331 = vsel %vm314, %v183, 0
  %v334 = vsel %vm314, %v186, 0
  %v337 = vsel %vm314, %v189, 0
  %339 = vmatprep.subr.bf16.mxu0 0
  %340 = vmatpush1.bf16.msra.mxu0 %v285
  %341 = vmatprep.subr.bf16.mxu0 0
  %342 = vmatpush1.bf16.msra.mxu0 %v284
  %343 = vmatprep.subr.bf16.mxu0 0
  %344 = vmatpush1.bf16.msra.mxu0 %v283
  %345 = vmatprep.subr.bf16.mxu0 0
  %346 = vmatpush1.bf16.msra.mxu0 %v282
  %347 = vmatprep.subr.bf16.mxu0 0
  %348 = vmatpush1.bf16.msra.mxu0 %v281
  %349 = vmatprep.subr.bf16.mxu0 0
  %350 = vmatpush1.bf16.msra.mxu0 %v280
  %351 = vmatprep.subr.bf16.mxu0 0
  %352 = vmatpush1.bf16.msra.mxu0 %v279
  %353 = vmatprep.subr.bf16.mxu0 0
  %354 = vmatpush1.bf16.msra.mxu0 %v278
  %355 = vmatprep.subr.bf16.mxu0 0
  %356 = vmatpush2.bf16.msra.mxu0 %v293
  %357 = vmatprep.subr.bf16.mxu0 0
  %358 = vmatpush2.bf16.msra.mxu0 %v292
  %359 = vmatprep.subr.bf16.mxu0 0
  %360 = vmatpush2.bf16.msra.mxu0 %v291
  %361 = vmatprep.subr.bf16.mxu0 0
  %362 = vmatpush2.bf16.msra.mxu0 %v290
  %363 = vmatprep.subr.bf16.mxu0 0
  %364 = vmatpush2.bf16.msra.mxu0 %v289
  %365 = vmatprep.subr.bf16.mxu0 0
  %366 = vmatpush2.bf16.msra.mxu0 %v288
  %367 = vmatprep.subr.bf16.mxu0 0
  %368 = vmatpush2.bf16.msra.mxu0 %v287
  %369 = vmatprep.subr.bf16.mxu0 0
  %370 = vmatpush2.bf16.msra.mxu0 %v286
  %371 = vmatprep.mubr.bf16.mxu0 %v167
  %372 = vmatmul.mubr.bf16.gmra.mxu0 %v166
  %v373 = vpop.f32.mrf.mxu0
  %v374 = vadd.f32 0.0, %v373
  %v375 = vpop.f32.mrf.mxu0
  %v376 = vpop.f32.mrf.mxu0
  %v377 = vadd.f32 0.0, %v376
  %v378 = vpop.f32.mrf.mxu0
  %379 = vmatprep.mubr.bf16.mxu0 %v170
  %380 = vmatmul.mubr.bf16.gmra.mxu0 %v169
  %v381 = vpop.f32.mrf.mxu0
  %v382 = vadd.f32 0.0, %v381
  %v383 = vpop.f32.mrf.mxu0
  %v384 = vpop.f32.mrf.mxu0
  %v385 = vadd.f32 0.0, %v384
  %v386 = vpop.f32.mrf.mxu0
  %387 = vmatprep.mubr.bf16.mxu0 %v173
  %388 = vmatmul.mubr.bf16.gmra.mxu0 %v172
  %v389 = vpop.f32.mrf.mxu0
  %v390 = vadd.f32 0.0, %v389
  %v391 = vpop.f32.mrf.mxu0
  %v392 = vpop.f32.mrf.mxu0
  %v393 = vadd.f32 0.0, %v392
  %v394 = vpop.f32.mrf.mxu0
  %395 = vmatprep.mubr.bf16.mxu0 %v176
  %396 = vmatmul.mubr.bf16.gmra.mxu0 %v175
  %v397 = vpop.f32.mrf.mxu0
  %v398 = vadd.f32 0.0, %v397
  %v399 = vpop.f32.mrf.mxu0
  %v400 = vpop.f32.mrf.mxu0
  %v401 = vadd.f32 0.0, %v400
  %v402 = vpop.f32.mrf.mxu0
  %403 = vmatprep.mubr.bf16.mxu0 %v179
  %404 = vmatmul.mubr.bf16.gmra.mxu0 %v178
  %v405 = vpop.f32.mrf.mxu0
  %v406 = vadd.f32 0.0, %v405
  %v407 = vpop.f32.mrf.mxu0
  %v408 = vpop.f32.mrf.mxu0
  %v409 = vadd.f32 0.0, %v408
  %v410 = vpop.f32.mrf.mxu0
  %411 = vmatprep.mubr.bf16.mxu0 %v182
  %412 = vmatmul.mubr.bf16.gmra.mxu0 %v181
  %v413 = vpop.f32.mrf.mxu0
  %v414 = vadd.f32 0.0, %v413
  %v415 = vpop.f32.mrf.mxu0
  %v416 = vpop.f32.mrf.mxu0
  %v417 = vadd.f32 0.0, %v416
  %v418 = vpop.f32.mrf.mxu0
  %419 = vmatprep.mubr.bf16.mxu0 %v185
  %420 = vmatmul.mubr.bf16.gmra.mxu0 %v184
  %v421 = vpop.f32.mrf.mxu0
  %v422 = vadd.f32 0.0, %v421
  %v423 = vpop.f32.mrf.mxu0
  %v424 = vpop.f32.mrf.mxu0
  %v425 = vadd.f32 0.0, %v424
  %v426 = vpop.f32.mrf.mxu0
  %427 = vmatprep.mubr.bf16.mxu0 %v188
  %428 = vmatmul.mubr.bf16.gmra.mxu0 %v187
  %v429 = vpop.f32.mrf.mxu0
  %v430 = vadd.f32 0.0, %v429
  %v431 = vpop.f32.mrf.mxu0
  %v432 = vpop.f32.mrf.mxu0
  %v433 = vadd.f32 0.0, %v432
  %v434 = vpop.f32.mrf.mxu0
  %435 = vdwg.mxu0
  %436 = vmatprep.subr.bf16.mxu0 0
  %437 = vmatpush1.bf16.msra.mxu0 0
  %438 = vmatprep.subr.bf16.mxu0 0
  %439 = vmatpush1.bf16.msra.mxu0 0
  %440 = vmatprep.subr.bf16.mxu0 0
  %441 = vmatpush1.bf16.msra.mxu0 0
  %442 = vmatprep.subr.bf16.mxu0 0
  %443 = vmatpush1.bf16.msra.mxu0 0
  %444 = vmatprep.subr.bf16.mxu0 0
  %445 = vmatpush1.bf16.msra.mxu0 0
  %446 = vmatprep.subr.bf16.mxu0 0
  %447 = vmatpush1.bf16.msra.mxu0 0
  %448 = vmatprep.subr.bf16.mxu0 0
  %449 = vmatpush1.bf16.msra.mxu0 %v295
  %450 = vmatprep.subr.bf16.mxu0 0
  %451 = vmatpush1.bf16.msra.mxu0 %v294
  %452 = vmatprep.subr.bf16.mxu0 0
  %453 = vmatpush2.bf16.msra.mxu0 0
  %454 = vmatprep.subr.bf16.mxu0 0
  %455 = vmatpush2.bf16.msra.mxu0 0
  %456 = vmatprep.subr.bf16.mxu0 0
  %457 = vmatpush2.bf16.msra.mxu0 0
  %458 = vmatprep.subr.bf16.mxu0 0
  %459 = vmatpush2.bf16.msra.mxu0 0
  %460 = vmatprep.subr.bf16.mxu0 0
  %461 = vmatpush2.bf16.msra.mxu0 0
  %462 = vmatprep.subr.bf16.mxu0 0
  %463 = vmatpush2.bf16.msra.mxu0 0
  %464 = vmatprep.subr.bf16.mxu0 0
  %465 = vmatpush2.bf16.msra.mxu0 0
  %466 = vmatprep.subr.bf16.mxu0 0
  %467 = vmatpush2.bf16.msra.mxu0 0
  %468 = vmatprep.mubr.bf16.mxu0 0
  %469 = vmatmul.mubr.bf16.gmra.mxu0 %v316
  %v470 = vpop.f32.mrf.mxu0
  %v471 = vadd.f32 %v374, %v470
  %v472 = vpop.f32.mrf.mxu0
  %v473 = vpop.f32.mrf.mxu0
  %v474 = vadd.f32 %v377, %v473
  %v475 = vpop.f32.mrf.mxu0
  %476 = vmatprep.mubr.bf16.mxu0 0
  %477 = vmatmul.mubr.bf16.gmra.mxu0 %v319
  %v478 = vpop.f32.mrf.mxu0
  %v479 = vadd.f32 %v382, %v478
  %v480 = vpop.f32.mrf.mxu0
  %v481 = vpop.f32.mrf.mxu0
  %v482 = vadd.f32 %v385, %v481
  %v483 = vpop.f32.mrf.mxu0
  %484 = vmatprep.mubr.bf16.mxu0 0
  %485 = vmatmul.mubr.bf16.gmra.mxu0 %v322
  %v486 = vpop.f32.mrf.mxu0
  %v487 = vadd.f32 %v390, %v486
  %v488 = vpop.f32.mrf.mxu0
  %v489 = vpop.f32.mrf.mxu0
  %v490 = vadd.f32 %v393, %v489
  %v491 = vpop.f32.mrf.mxu0
  %492 = vmatprep.mubr.bf16.mxu0 0
  %493 = vmatmul.mubr.bf16.gmra.mxu0 %v325
  %v494 = vpop.f32.mrf.mxu0
  %v495 = vadd.f32 %v398, %v494
  %v496 = vpop.f32.mrf.mxu0
  %v497 = vpop.f32.mrf.mxu0
  %v498 = vadd.f32 %v401, %v497
  %v499 = vpop.f32.mrf.mxu0
  %500 = vmatprep.mubr.bf16.mxu0 0
  %501 = vmatmul.mubr.bf16.gmra.mxu0 %v328
  %v502 = vpop.f32.mrf.mxu0
  %v503 = vadd.f32 %v406, %v502
  %v504 = vpop.f32.mrf.mxu0
  %v505 = vpop.f32.mrf.mxu0
  %v506 = vadd.f32 %v409, %v505
  %v507 = vpop.f32.mrf.mxu0
  %508 = vmatprep.mubr.bf16.mxu0 0
  %509 = vmatmul.mubr.bf16.gmra.mxu0 %v331
  %v510 = vpop.f32.mrf.mxu0
  %v511 = vadd.f32 %v414, %v510
  %v512 = vpop.f32.mrf.mxu0
  %v513 = vpop.f32.mrf.mxu0
  %v514 = vadd.f32 %v417, %v513
  %v515 = vpop.f32.mrf.mxu0
  %516 = vmatprep.mubr.bf16.mxu0 0
  %517 = vmatmul.mubr.bf16.gmra.mxu0 %v334
  %v518 = vpop.f32.mrf.mxu0
  %v519 = vadd.f32 %v422, %v518
  %v520 = vpop.f32.mrf.mxu0
  %v521 = vpop.f32.mrf.mxu0
  %v522 = vadd.f32 %v425, %v521
  %v523 = vpop.f32.mrf.mxu0
  %524 = vmatprep.mubr.bf16.mxu0 0
  %525 = vmatmul.mubr.bf16.gmra.mxu0 %v337
  %v526 = vpop.f32.mrf.mxu0
  %v527 = vadd.f32 %v430, %v526
  %v528 = vpop.f32.mrf.mxu0
  %v529 = vpop.f32.mrf.mxu0
  %v530 = vadd.f32 %v433, %v529
  %v531 = vpop.f32.mrf.mxu0
  %532 = vdwg.mxu0
  %vm533 = vcmask 523264
  %v534 = vsel %vm533, %v471, 0.0
  %v535 = vsel %vm533, %v474, 0.0
  %v536 = vadd.f32 %v534, %v535
  %v537 = vsel %vm533, %v479, 0.0
  %v538 = vadd.f32 %v536, %v537
  %v539 = vsel %vm533, %v482, 0.0
  %v540 = vadd.f32 %v538, %v539
  %v541 = vsel %vm533, %v487, 0.0
  %v542 = vadd.f32 %v540, %v541
  %v543 = vsel %vm533, %v490, 0.0
  %v544 = vadd.f32 %v542, %v543
  %v545 = vsel %vm533, %v495, 0.0
  %v546 = vadd.f32 %v544, %v545
  %v547 = vsel %vm533, %v498, 0.0
  %v548 = vadd.f32 %v546, %v547
  %v549 = vsel %vm533, %v503, 0.0
  %v550 = vadd.f32 %v548, %v549
  %v551 = vsel %vm533, %v506, 0.0
  %v552 = vadd.f32 %v550, %v551
  %v553 = vsel %vm533, %v511, 0.0
  %v554 = vadd.f32 %v552, %v553
  %v555 = vsel %vm533, %v514, 0.0
  %v556 = vadd.f32 %v554, %v555
  %v557 = vsel %vm533, %v519, 0.0
  %v558 = vadd.f32 %v556, %v557
  %v559 = vsel %vm533, %v522, 0.0
  %v560 = vadd.f32 %v558, %v559
  %v561 = vsel %vm533, %v527, 0.0
  %v562 = vadd.f32 %v560, %v561
  %v563 = vsel %vm533, %v530, 0.0
  %v564 = vadd.f32 %v562, %v563
  %v565 = vrot.slane %v564, 4
  %v566 = vadd.f32 %v564, %v565
  %v567 = vrot.slane %v566, 2
  %v568 = vadd.f32 %v566, %v567
  %v569 = vrot.slane %v568, 1
  %v570 = vadd.f32 %v568, %v569
  %v571 = vrcp.pop 128.0
  %v572 = vmul.f32 %v570, %v571
  %v573 = vsub.f32 %v471, %v572
  %v574 = vsub.f32 %v474, %v572
  %v575 = vsub.f32 %v479, %v572
  %v576 = vsub.f32 %v482, %v572
  %v577 = vsub.f32 %v487, %v572
  %v578 = vsub.f32 %v490, %v572
  %v579 = vsub.f32 %v495, %v572
  %v580 = vsub.f32 %v498, %v572
  %v581 = vsub.f32 %v503, %v572
  %v582 = vsub.f32 %v506, %v572
  %v583 = vsub.f32 %v511, %v572
  %v584 = vsub.f32 %v514, %v572
  %v585 = vsub.f32 %v519, %v572
  %v586 = vsub.f32 %v522, %v572
  %v587 = vsub.f32 %v527, %v572
  %v588 = vsub.f32 %v530, %v572
  %v589 = vmul.f32 %v573, %v573
  %v590 = vmul.f32 %v574, %v574
  %v591 = vmul.f32 %v575, %v575
  %v592 = vmul.f32 %v576, %v576
  %v593 = vmul.f32 %v577, %v577
  %v594 = vmul.f32 %v578, %v578
  %v595 = vmul.f32 %v579, %v579
  %v596 = vmul.f32 %v580, %v580
  %v597 = vmul.f32 %v581, %v581
  %v598 = vmul.f32 %v582, %v582
  %v599 = vmul.f32 %v583, %v583
  %v600 = vmul.f32 %v584, %v584
  %v601 = vmul.f32 %v585, %v585
  %v602 = vmul.f32 %v586, %v586
  %v603 = vmul.f32 %v587, %v587
  %v604 = vmul.f32 %v588, %v588
  %v605 = vsel %vm533, %v589, 0.0
  %v606 = vsel %vm533, %v590, 0.0
  %v607 = vadd.f32 %v605, %v606
  %v608 = vsel %vm533, %v591, 0.0
  %v609 = vadd.f32 %v607, %v608
  %v610 = vsel %vm533, %v592, 0.0
  %v611 = vadd.f32 %v609, %v610
  %v612 = vsel %vm533, %v593, 0.0
  %v613 = vadd.f32 %v611, %v612
  %v614 = vsel %vm533, %v594, 0.0
  %v615 = vadd.f32 %v613, %v614
  %v616 = vsel %vm533, %v595, 0.0
  %v617 = vadd.f32 %v615, %v616
  %v618 = vsel %vm533, %v596, 0.0
  %v619 = vadd.f32 %v617, %v618
  %v620 = vsel %vm533, %v597, 0.0
  %v621 = vadd.f32 %v619, %v620
  %v622 = vsel %vm533, %v598, 0.0
  %v623 = vadd.f32 %v621, %v622
  %v624 = vsel %vm533, %v599, 0.0
  %v625 = vadd.f32 %v623, %v624
  %v626 = vsel %vm533, %v600, 0.0
  %v627 = vadd.f32 %v625, %v626
  %v628 = vsel %vm533, %v601, 0.0
  %v629 = vadd.f32 %v627, %v628
  %v630 = vsel %vm533, %v602, 0.0
  %v631 = vadd.f32 %v629, %v630
  %v632 = vsel %vm533, %v603, 0.0
  %v633 = vadd.f32 %v631, %v632
  %v634 = vsel %vm533, %v604, 0.0
  %v635 = vadd.f32 %v633, %v634
  %v636 = vrot.slane %v635, 4
  %v637 = vadd.f32 %v635, %v636
  %v638 = vrot.slane %v637, 2
  %v639 = vadd.f32 %v637, %v638
  %v640 = vrot.slane %v639, 1
  %v641 = vadd.f32 %v639, %v640
  %v642 = vmul.f32 %v641, %v571
  %v643 = vld [vmem:[%s2] sm:$0x1]
  %v644 = vadd.f32 %v642, 1e-05
  %v645 = vrsqrt.pop %v644
  %v646 = vmul.f32 %v643, %v645
  %v648 = vlaneseq
  %v649 = vshrl.u32 %v648, 7
  %v650 = vsub.s32 0, %v649
  %v651 = vrot.slane %v646, %v650
  %v653 = vmul.f32 %v573, %v651
  %v654 = vmul.f32 %v574, %v651
  %v655 = vmul.f32 %v575, %v651
  %v656 = vmul.f32 %v576, %v651
  %v657 = vmul.f32 %v577, %v651
  %v658 = vmul.f32 %v578, %v651
  %v659 = vmul.f32 %v579, %v651
  %v660 = vmul.f32 %v580, %v651
  %v661 = vmul.f32 %v581, %v651
  %v662 = vmul.f32 %v582, %v651
  %v663 = vmul.f32 %v583, %v651
  %v664 = vmul.f32 %v584, %v651
  %v665 = vmul.f32 %v585, %v651
  %v666 = vmul.f32 %v586, %v651
  %v667 = vmul.f32 %v587, %v651
  %v668 = vmul.f32 %v588, %v651
  %v669 = vld [vmem:[%s3] sm:$0x1]
  %v671 = vlaneseq
  %v672 = vshrl.u32 %v671, 7
  %v673 = vsub.s32 0, %v672
  %v674 = vrot.slane %v669, %v673
  %v676 = vadd.f32 %v653, %v674
  %v677 = vadd.f32 %v654, %v674
  %v678 = vadd.f32 %v655, %v674
  %v679 = vadd.f32 %v656, %v674
  %v680 = vadd.f32 %v657, %v674
  %v681 = vadd.f32 %v658, %v674
  %v682 = vadd.f32 %v659, %v674
  %v683 = vadd.f32 %v660, %v674
  %v684 = vadd.f32 %v661, %v674
  %v685 = vadd.f32 %v662, %v674
  %v686 = vadd.f32 %v663, %v674
  %v687 = vadd.f32 %v664, %v674
  %v688 = vadd.f32 %v665, %v674
  %v689 = vadd.f32 %v666, %v674
  %v690 = vadd.f32 %v667, %v674
  %v691 = vadd.f32 %v668, %v674
  %v692 = vmax.f32 %v676, 0.0
  %v693 = vmax.f32 %v677, 0.0
  %v694 = vmax.f32 %v678, 0.0
  %v695 = vmax.f32 %v679, 0.0
  %v696 = vmax.f32 %v680, 0.0
  %v697 = vmax.f32 %v681, 0.0
  %v698 = vmax.f32 %v682, 0.0
  %v699 = vmax.f32 %v683, 0.0
  %v700 = vmax.f32 %v684, 0.0
  %v701 = vmax.f32 %v685, 0.0
  %v702 = vmax.f32 %v686, 0.0
  %v703 = vmax.f32 %v687, 0.0
  %v704 = vmax.f32 %v688, 0.0
  %v705 = vmax.f32 %v689, 0.0
  %v706 = vmax.f32 %v690, 0.0
  %v707 = vmax.f32 %v691, 0.0
  %v708 = vpack.c.bf16 %v693, %v692
  %v709 = vpack.c.bf16 %v695, %v694
  %v710 = vpack.c.bf16 %v697, %v696
  %v711 = vpack.c.bf16 %v699, %v698
  %v712 = vpack.c.bf16 %v701, %v700
  %v713 = vpack.c.bf16 %v703, %v702
  %v714 = vpack.c.bf16 %v705, %v704
  %v715 = vpack.c.bf16 %v707, %v706
  %v724 = vunpack.c.l.b16 %v708
  %v725 = vunpack.c.h.b16 %v708
  %v726 = vunpack.c.l.b16 %v709
  %v727 = vunpack.c.h.b16 %v709
  %v728 = vunpack.c.l.b16 %v710
  %v729 = vunpack.c.h.b16 %v710
  %v730 = vunpack.c.l.b16 %v711
  %v731 = vunpack.c.h.b16 %v711
  %v732 = vunpack.c.l.b16 %v712
  %v733 = vunpack.c.h.b16 %v712
  %v734 = vunpack.c.l.b16 %v713
  %v735 = vunpack.c.h.b16 %v713
  %v736 = vunpack.c.l.b16 %v714
  %v737 = vunpack.c.h.b16 %v714
  %v738 = vunpack.c.l.b16 %v715
  %v739 = vunpack.c.h.b16 %v715
  %v740 = vpack.c.b16 %v724, %v724
  %v741 = vpack.c.b16 %v725, %v725
  %v742 = vpack.c.b16 %v726, %v726
  %v743 = vpack.c.b16 %v727, %v727
  %v744 = vpack.c.b16 %v728, %v728
  %v745 = vpack.c.b16 %v729, %v729
  %v746 = vpack.c.b16 %v730, %v730
  %v747 = vpack.c.b16 %v731, %v731
  %v748 = vpack.c.b16 %v732, %v732
  %v749 = vpack.c.b16 %v733, %v733
  %v750 = vpack.c.b16 %v734, %v734
  %v751 = vpack.c.b16 %v735, %v735
  %v752 = vpack.c.b16 %v736, %v736
  %v753 = vpack.c.b16 %v737, %v737
  %v754 = vpack.c.b16 %v738, %v738
  %v755 = vpack.c.b16 %v739, %v739
  %vm772 = vcmask 519168
  %773 = vst.msk [vmem:[%s4] sm:$0xf] %vm772, %v740
  %774 = vst.msk [vmem:[%s4 + $0x4] sm:$0xf] %vm772, %v741
  %775 = vst.msk [vmem:[%s4 + $0x8] sm:$0xf] %vm772, %v742
  %776 = vst.msk [vmem:[%s4 + $0xc] sm:$0xf] %vm772, %v743
  %777 = vst.msk [vmem:[%s4 + $0x10] sm:$0xf] %vm772, %v744
  %778 = vst.msk [vmem:[%s4 + $0x14] sm:$0xf] %vm772, %v745
  %779 = vst.msk [vmem:[%s4 + $0x18] sm:$0xf] %vm772, %v746
  %780 = vst.msk [vmem:[%s4 + $0x1c] sm:$0xf] %vm772, %v747
  %781 = vst.msk [vmem:[%s4 + $0x20] sm:$0xf] %vm772, %v748
  %782 = vst.msk [vmem:[%s4 + $0x24] sm:$0xf] %vm772, %v749
  %783 = vst.msk [vmem:[%s4 + $0x28] sm:$0xf] %vm772, %v750
  %784 = vst.msk [vmem:[%s4 + $0x2c] sm:$0xf] %vm772, %v751
  %785 = vst.msk [vmem:[%s4 + $0x30] sm:$0xf] %vm772, %v752
  %786 = vst.msk [vmem:[%s4 + $0x34] sm:$0xf] %vm772, %v753
  %787 = vst.msk [vmem:[%s4 + $0x38] sm:$0xf] %vm772, %v754
  %788 = vst.msk [vmem:[%s4 + $0x3c] sm:$0xf] %vm772, %v755
  // Predicated region
  $region18: #{patch_embed_forward.2} parent=0 // pred_check
    _
  $region19: #{patch_embed_forward.2} parent=0 // pred_check_branch
    %790 = sbr.rel (0) target = $region21
  $region20: #{patch_embed_forward.2} parent=0 // pred_region
    _
  $region21: #{patch_embed_forward.2} parent=0 // pred_fallthru
    _
  // Predicated region
  $region22: #{patch_embed_forward.2} parent=0 // pred_check
    _
  $region23: #{patch_embed_forward.2} parent=0 // pred_check_branch
    %792 = sbr.rel (0) target = $region25
  $region24: #{patch_embed_forward.2} parent=0 // pred_region
    _
  $region25: #{patch_embed_forward.2} parent=0 // pred_fallthru
    _

// kernel: patch_embed_forward.3
$region0: #{patch_embed_forward.3}
  #allocation0 [shape = 'u32[]', space=smem, size = 0x4, offset = 0x4, fixed_abs, tag = 'smem constant byte address 0x4 - core index']
  #allocation1 [shape = 'u32[144,128]{1,0:T(1,128)}', space=vmem, size = 0x12000, scoped, tag = 'internal scratch']
  %s0 = inlined_call_operand.vmem [shape: bf16[32,576], index: 0, kind: input, shape index: {}]
  %s1 = inlined_call_operand.vmem [shape: bf16[576,128], index: 1, kind: input, shape index: {}]
  %s2 = inlined_call_operand.vmem [shape: f32[1,128], index: 2, kind: input, shape index: {}]
  %s3 = inlined_call_operand.vmem [shape: f32[1,128], index: 3, kind: input, shape index: {}]
  %s4 = inlined_call_operand.hbm [shape: f32[32,128], index: 4, kind: output, shape index: {}]
  %s5 = sld [smem:[#allocation0]]
  $region26: #{patch_embed_forward.3} parent=0
    _
  %s7 = ssub.s32 1, %s5
  %s8 = scalar_select 0, %s7, %s5
  $region1: #{patch_embed_forward.3} parent=0
    #allocation2 [shape = 'u8[16384]{0}', space=vmem, size = 0x4000, scoped, tag = 'output window, operand 0, single buffered']
    #allocation3 [shape = 's32[1]{0}', space=sflag, size = 0x4, scoped, tag = 'scoped memory for patch_embed_forward.3']
    %9 = vsyncpa [#allocation3], 0
    // Predicated region
    $region2: #{patch_embed_forward.3} parent=1 // pred_check
      _
    $region3: #{patch_embed_forward.3} parent=1 // pred_check_branch
      %11 = sbr.rel (0) target = $region5
    $region4: #{patch_embed_forward.3} parent=1 // pred_region
      _
    $region5: #{patch_embed_forward.3} parent=1 // pred_fallthru
      _
    // Predicated region
    $region6: #{patch_embed_forward.3} parent=1 // pred_check
      _
    $region7: #{patch_embed_forward.3} parent=1 // pred_check_branch
      %13 = sbr.rel (0) target = $region9
    $region8: #{patch_embed_forward.3} parent=1 // pred_region
      _
    $region9: #{patch_embed_forward.3} parent=1 // pred_fallthru
      _
    // Predicated region
    $region10: #{patch_embed_forward.3} parent=1 // pred_check
      _
    $region11: #{patch_embed_forward.3} parent=1 // pred_check_branch
      %15 = sbr.rel (0) target = $region13
    $region12: #{patch_embed_forward.3} parent=1 // pred_region
      _
    $region13: #{patch_embed_forward.3} parent=1 // pred_fallthru
      _
    // Predicated region
    $region14: #{patch_embed_forward.3} parent=1 // pred_check
      _
    $region15: #{patch_embed_forward.3} parent=1 // pred_check_branch
      %17 = sbr.rel (0) target = $region17
    $region16: #{patch_embed_forward.3} parent=1 // pred_region
      _
    $region17: #{patch_embed_forward.3} parent=1 // pred_fallthru
      _
    %v19 = vld [vmem:[%s0] sm:$0xff]
    %v20 = vld [vmem:[%s0 + $0x8] sm:$0xff]
    %v21 = vld [vmem:[%s0 + $0x10] sm:$0xf]
    %v22 = vld [vmem:[%s0 + $0x14] sm:$0xff]
    %v23 = vld [vmem:[%s0 + $0x1c] sm:$0xff]
    %v24 = vld [vmem:[%s0 + $0x24] sm:$0xf]
    %v25 = vld [vmem:[%s0 + $0x28] sm:$0xff]
    %v26 = vld [vmem:[%s0 + $0x30] sm:$0xff]
    %v27 = vld [vmem:[%s0 + $0x38] sm:$0xf]
    %v28 = vld [vmem:[%s0 + $0x3c] sm:$0xff]
    %v29 = vld [vmem:[%s0 + $0x44] sm:$0xff]
    %v30 = vld [vmem:[%s0 + $0x4c] sm:$0xf]
    %v31 = vld [vmem:[%s1] sm:$0xf]
    %v32 = vld [vmem:[%s1 + $0x4] sm:$0xf]
    %v33 = vld [vmem:[%s1 + $0x8] sm:$0xf]
    %v34 = vld [vmem:[%s1 + $0xc] sm:$0xf]
    %v35 = vld [vmem:[%s1 + $0x10] sm:$0xf]
    %v36 = vld [vmem:[%s1 + $0x14] sm:$0xf]
    %v37 = vld [vmem:[%s1 + $0x18] sm:$0xf]
    %v38 = vld [vmem:[%s1 + $0x1c] sm:$0xf]
    %v39 = vld [vmem:[%s1 + $0x20] sm:$0xf]
    %v40 = vld [vmem:[%s1 + $0x24] sm:$0xf]
    %v41 = vld [vmem:[%s1 + $0x28] sm:$0xf]
    %v42 = vld [vmem:[%s1 + $0x2c] sm:$0xf]
    %v43 = vld [vmem:[%s1 + $0x30] sm:$0xf]
    %v44 = vld [vmem:[%s1 + $0x34] sm:$0xf]
    %v45 = vld [vmem:[%s1 + $0x38] sm:$0xf]
    %v46 = vld [vmem:[%s1 + $0x3c] sm:$0xf]
    %v47 = vld [vmem:[%s1 + $0x40] sm:$0xf]
    %v48 = vld [vmem:[%s1 + $0x44] sm:$0xf]
    %v49 = vld [vmem:[%s1 + $0x48] sm:$0xf]
    %v50 = vld [vmem:[%s1 + $0x4c] sm:$0xf]
    %v51 = vld [vmem:[%s1 + $0x50] sm:$0xf]
    %v52 = vld [vmem:[%s1 + $0x54] sm:$0xf]
    %v53 = vld [vmem:[%s1 + $0x58] sm:$0xf]
    %v54 = vld [vmem:[%s1 + $0x5c] sm:$0xf]
    %v55 = vld [vmem:[%s1 + $0x60] sm:$0xf]
    %v56 = vld [vmem:[%s1 + $0x64] sm:$0xf]
    %v57 = vld [vmem:[%s1 + $0x68] sm:$0xf]
    %v58 = vld [vmem:[%s1 + $0x6c] sm:$0xf]
    %v59 = vld [vmem:[%s1 + $0x70] sm:$0xf]
    %v60 = vld [vmem:[%s1 + $0x74] sm:$0xf]
    %v61 = vld [vmem:[%s1 + $0x78] sm:$0xf]
    %v62 = vld [vmem:[%s1 + $0x7c] sm:$0xf]
    %v63 = vld [vmem:[%s1 + $0x80] sm:$0xf]
    %v64 = vld [vmem:[%s1 + $0x84] sm:$0xf]
    %v65 = vld [vmem:[%s1 + $0x88] sm:$0xf]
    %v66 = vld [vmem:[%s1 + $0x8c] sm:$0xf]
    %v67 = vld [vmem:[%s1 + $0x90] sm:$0xf]
    %v68 = vld [vmem:[%s1 + $0x94] sm:$0xf]
    %v69 = vld [vmem:[%s1 + $0x98] sm:$0xf]
    %v70 = vld [vmem:[%s1 + $0x9c] sm:$0xf]
    %v71 = vld [vmem:[%s1 + $0xa0] sm:$0xf]
    %v72 = vld [vmem:[%s1 + $0xa4] sm:$0xf]
    %v73 = vld [vmem:[%s1 + $0xa8] sm:$0xf]
    %v74 = vld [vmem:[%s1 + $0xac] sm:$0xf]
    %v75 = vld [vmem:[%s1 + $0xb0] sm:$0xf]
    %v76 = vld [vmem:[%s1 + $0xb4] sm:$0xf]
    %v77 = vld [vmem:[%s1 + $0xb8] sm:$0xf]
    %v78 = vld [vmem:[%s1 + $0xbc] sm:$0xf]
    %v79 = vld [vmem:[%s1 + $0xc0] sm:$0xf]
    %v80 = vld [vmem:[%s1 + $0xc4] sm:$0xf]
    %v81 = vld [vmem:[%s1 + $0xc8] sm:$0xf]
    %v82 = vld [vmem:[%s1 + $0xcc] sm:$0xf]
    %v83 = vld [vmem:[%s1 + $0xd0] sm:$0xf]
    %v84 = vld [vmem:[%s1 + $0xd4] sm:$0xf]
    %v85 = vld [vmem:[%s1 + $0xd8] sm:$0xf]
    %v86 = vld [vmem:[%s1 + $0xdc] sm:$0xf]
    %v87 = vld [vmem:[%s1 + $0xe0] sm:$0xf]
    %v88 = vld [vmem:[%s1 + $0xe4] sm:$0xf]
    %v89 = vld [vmem:[%s1 + $0xe8] sm:$0xf]
    %v90 = vld [vmem:[%s1 + $0xec] sm:$0xf]
    %v91 = vld [vmem:[%s1 + $0xf0] sm:$0xf]
    %v92 = vld [vmem:[%s1 + $0xf4] sm:$0xf]
    %v93 = vld [vmem:[%s1 + $0xf8] sm:$0xf]
    %v94 = vld [vmem:[%s1 + $0xfc] sm:$0xf]
    %v95 = vld [vmem:[%s1 + $0x100] sm:$0xf]
    %v96 = vld [vmem:[%s1 + $0x104] sm:$0xf]
    %v97 = vld [vmem:[%s1 + $0x108] sm:$0xf]
    %v98 = vld [vmem:[%s1 + $0x10c] sm:$0xf]
    %v99 = vld [vmem:[%s1 + $0x110] sm:$0xf]
    %v100 = vld [vmem:[%s1 + $0x114] sm:$0xf]
    %v101 = vld [vmem:[%s1 + $0x118] sm:$0xf]
    %v102 = vld [vmem:[%s1 + $0x11c] sm:$0xf]
    %v115 = vunpack.c.l.b16 %v19
    %v116 = vunpack.c.h.b16 %v19
    %v117 = vunpack.c.l.b16 %v20
    %v118 = vunpack.c.h.b16 %v20
    %v119 = vunpack.c.l.b16 %v21
    %v120 = vunpack.c.l.b16 %v22
    %v121 = vunpack.c.h.b16 %v22
    %v122 = vunpack.c.l.b16 %v23
    %v123 = vunpack.c.h.b16 %v23
    %v124 = vunpack.c.l.b16 %v24
    %v125 = vunpack.c.l.b16 %v25
    %v126 = vunpack.c.h.b16 %v25
    %v127 = vunpack.c.l.b16 %v26
    %v128 = vunpack.c.h.b16 %v26
    %v129 = vunpack.c.l.b16 %v27
    %v130 = vunpack.c.l.b16 %v28
    %v131 = vunpack.c.h.b16 %v28
    %v132 = vunpack.c.l.b16 %v29
    %v133 = vunpack.c.h.b16 %v29
    %v134 = vunpack.c.l.b16 %v30
    %v135 = vpack.c.b16 %v120, %v115
    %v136 = vpack.c.b16 %v121, %v116
    %v137 = vpack.c.b16 %v122, %v117
    %v138 = vpack.c.b16 %v123, %v118
    %v139 = vpack.c.b16 %v124, %v119
    %v140 = vpack.c.b16 %v130, %v125
    %v141 = vpack.c.b16 %v131, %v126
    %v142 = vpack.c.b16 %v132, %v127
    %v143 = vpack.c.b16 %v133, %v128
    %v144 = vpack.c.b16 %v134, %v129
    %v225 = vunpack.c.l.b16 %v31
    %v226 = vunpack.c.l.b16 %v32
    %v227 = vunpack.c.l.b16 %v33
    %v228 = vunpack.c.l.b16 %v34
    %v229 = vunpack.c.l.b16 %v35
    %v230 = vunpack.c.l.b16 %v36
    %v231 = vunpack.c.l.b16 %v37
    %v232 = vunpack.c.l.b16 %v38
    %v233 = vunpack.c.l.b16 %v39
    %v234 = vunpack.c.l.b16 %v40
    %v235 = vunpack.c.l.b16 %v41
    %v236 = vunpack.c.l.b16 %v42
    %v237 = vunpack.c.l.b16 %v43
    %v238 = vunpack.c.l.b16 %v44
    %v239 = vunpack.c.l.b16 %v45
    %v240 = vunpack.c.l.b16 %v46
    %v241 = vunpack.c.l.b16 %v47
    %v242 = vunpack.c.l.b16 %v48
    %v243 = vunpack.c.l.b16 %v49
    %v244 = vunpack.c.l.b16 %v50
    %v245 = vunpack.c.l.b16 %v51
    %v246 = vunpack.c.l.b16 %v52
    %v247 = vunpack.c.l.b16 %v53
    %v248 = vunpack.c.l.b16 %v54
    %v249 = vunpack.c.l.b16 %v55
    %v250 = vunpack.c.l.b16 %v56
    %v251 = vunpack.c.l.b16 %v57
    %v252 = vunpack.c.l.b16 %v58
    %v253 = vunpack.c.l.b16 %v59
    %v254 = vunpack.c.l.b16 %v60
    %v255 = vunpack.c.l.b16 %v61
    %v256 = vunpack.c.l.b16 %v62
    %v257 = vunpack.c.l.b16 %v63
    %v258 = vunpack.c.l.b16 %v64
    %v259 = vunpack.c.l.b16 %v65
    %v260 = vunpack.c.l.b16 %v66
    %v261 = vunpack.c.l.b16 %v67
    %v262 = vunpack.c.l.b16 %v68
    %v263 = vunpack.c.l.b16 %v69
    %v264 = vunpack.c.l.b16 %v70
    %v265 = vunpack.c.l.b16 %v71
    %v266 = vunpack.c.l.b16 %v72
    %v267 = vunpack.c.l.b16 %v73
    %v268 = vunpack.c.l.b16 %v74
    %v269 = vunpack.c.l.b16 %v75
    %v270 = vunpack.c.l.b16 %v76
    %v271 = vunpack.c.l.b16 %v77
    %v272 = vunpack.c.l.b16 %v78
    %v273 = vunpack.c.l.b16 %v79
    %v274 = vunpack.c.l.b16 %v80
    %v275 = vunpack.c.l.b16 %v81
    %v276 = vunpack.c.l.b16 %v82
    %v277 = vunpack.c.l.b16 %v83
    %v278 = vunpack.c.l.b16 %v84
    %v279 = vunpack.c.l.b16 %v85
    %v280 = vunpack.c.l.b16 %v86
    %v281 = vunpack.c.l.b16 %v87
    %v282 = vunpack.c.l.b16 %v88
    %v283 = vunpack.c.l.b16 %v89
    %v284 = vunpack.c.l.b16 %v90
    %v285 = vunpack.c.l.b16 %v91
    %v286 = vunpack.c.l.b16 %v92
    %v287 = vunpack.c.l.b16 %v93
    %v288 = vunpack.c.l.b16 %v94
    %v289 = vunpack.c.l.b16 %v95
    %v290 = vunpack.c.l.b16 %v96
    %v291 = vunpack.c.l.b16 %v97
    %v292 = vunpack.c.l.b16 %v98
    %v293 = vunpack.c.l.b16 %v99
    %v294 = vunpack.c.l.b16 %v100
    %v295 = vunpack.c.l.b16 %v101
    %v296 = vunpack.c.l.b16 %v102
    %v297 = vpack.c.b16 %v226, %v225
    %v298 = vpack.c.b16 %v228, %v227
    %v299 = vpack.c.b16 %v230, %v229
    %v300 = vpack.c.b16 %v232, %v231
    %v301 = vpack.c.b16 %v234, %v233
    %v302 = vpack.c.b16 %v236, %v235
    %v303 = vpack.c.b16 %v238, %v237
    %v304 = vpack.c.b16 %v240, %v239
    %v305 = vpack.c.b16 %v242, %v241
    %v306 = vpack.c.b16 %v244, %v243
    %v307 = vpack.c.b16 %v246, %v245
    %v308 = vpack.c.b16 %v248, %v247
    %v309 = vpack.c.b16 %v250, %v249
    %v310 = vpack.c.b16 %v252, %v251
    %v311 = vpack.c.b16 %v254, %v253
    %v312 = vpack.c.b16 %v256, %v255
    %v313 = vpack.c.b16 %v258, %v257
    %v314 = vpack.c.b16 %v260, %v259
    %v315 = vpack.c.b16 %v262, %v261
    %v316 = vpack.c.b16 %v264, %v263
    %v317 = vpack.c.b16 %v266, %v265
    %v318 = vpack.c.b16 %v268, %v267
    %v319 = vpack.c.b16 %v270, %v269
    %v320 = vpack.c.b16 %v272, %v271
    %v321 = vpack.c.b16 %v274, %v273
    %v322 = vpack.c.b16 %v276, %v275
    %v323 = vpack.c.b16 %v278, %v277
    %v324 = vpack.c.b16 %v280, %v279
    %v325 = vpack.c.b16 %v282, %v281
    %v326 = vpack.c.b16 %v284, %v283
    %v327 = vpack.c.b16 %v286, %v285
    %v328 = vpack.c.b16 %v288, %v287
    %v329 = vpack.c.b16 %v290, %v289
    %v330 = vpack.c.b16 %v292, %v291
    %v331 = vpack.c.b16 %v294, %v293
    %v332 = vpack.c.b16 %v296, %v295
    %vm369 = vcmask 523264
    %v371 = vsel %vm369, %v139, 0
    %v374 = vsel %vm369, %v144, 0
    %376 = vmatprep.subr.bf16.mxu0 0
    %377 = vmatpush1.bf16.msra.mxu0 %v304
    %378 = vmatprep.subr.bf16.mxu0 0
    %379 = vmatpush1.bf16.msra.mxu0 %v303
    %380 = vmatprep.subr.bf16.mxu0 0
    %381 = vmatpush1.bf16.msra.mxu0 %v302
    %382 = vmatprep.subr.bf16.mxu0 0
    %383 = vmatpush1.bf16.msra.mxu0 %v301
    %384 = vmatprep.subr.bf16.mxu0 0
    %385 = vmatpush1.bf16.msra.mxu0 %v300
    %386 = vmatprep.subr.bf16.mxu0 0
    %387 = vmatpush1.bf16.msra.mxu0 %v299
    %388 = vmatprep.subr.bf16.mxu0 0
    %389 = vmatpush1.bf16.msra.mxu0 %v298
    %390 = vmatprep.subr.bf16.mxu0 0
    %391 = vmatpush1.bf16.msra.mxu0 %v297
    %392 = vmatprep.subr.bf16.mxu0 0
    %393 = vmatpush2.bf16.msra.mxu0 %v312
    %394 = vmatprep.subr.bf16.mxu0 0
    %395 = vmatpush2.bf16.msra.mxu0 %v311
    %396 = vmatprep.subr.bf16.mxu0 0
    %397 = vmatpush2.bf16.msra.mxu0 %v310
    %398 = vmatprep.subr.bf16.mxu0 0
    %399 = vmatpush2.bf16.msra.mxu0 %v309
    %400 = vmatprep.subr.bf16.mxu0 0
    %401 = vmatpush2.bf16.msra.mxu0 %v308
    %402 = vmatprep.subr.bf16.mxu0 0
    %403 = vmatpush2.bf16.msra.mxu0 %v307
    %404 = vmatprep.subr.bf16.mxu0 0
    %405 = vmatpush2.bf16.msra.mxu0 %v306
    %406 = vmatprep.subr.bf16.mxu0 0
    %407 = vmatpush2.bf16.msra.mxu0 %v305
    %408 = vmatprep.mubr.bf16.mxu0 %v136
    %409 = vmatmul.mubr.bf16.gmra.mxu0 %v135
    %v410 = vpop.f32.mrf.mxu0
    %v411 = vadd.f32 0.0, %v410
    %v412 = vpop.f32.mrf.mxu0
    %v413 = vpop.f32.mrf.mxu0
    %v414 = vadd.f32 0.0, %v413
    %v415 = vpop.f32.mrf.mxu0
    %416 = vmatprep.mubr.bf16.mxu0 %v141
    %417 = vmatmul.mubr.bf16.gmra.mxu0 %v140
    %v418 = vpop.f32.mrf.mxu0
    %v419 = vadd.f32 0.0, %v418
    %v420 = vpop.f32.mrf.mxu0
    %v421 = vpop.f32.mrf.mxu0
    %v422 = vadd.f32 0.0, %v421
    %v423 = vpop.f32.mrf.mxu0
    %424 = vdwg.mxu0
    %425 = vmatprep.subr.bf16.mxu0 0
    %426 = vmatpush1.bf16.msra.mxu0 %v320
    %427 = vmatprep.subr.bf16.mxu0 0
    %428 = vmatpush1.bf16.msra.mxu0 %v319
    %429 = vmatprep.subr.bf16.mxu0 0
    %430 = vmatpush1.bf16.msra.mxu0 %v318
    %431 = vmatprep.subr.bf16.mxu0 0
    %432 = vmatpush1.bf16.msra.mxu0 %v317
    %433 = vmatprep.subr.bf16.mxu0 0
    %434 = vmatpush1.bf16.msra.mxu0 %v316
    %435 = vmatprep.subr.bf16.mxu0 0
    %436 = vmatpush1.bf16.msra.mxu0 %v315
    %437 = vmatprep.subr.bf16.mxu0 0
    %438 = vmatpush1.bf16.msra.mxu0 %v314
    %439 = vmatprep.subr.bf16.mxu0 0
    %440 = vmatpush1.bf16.msra.mxu0 %v313
    %441 = vmatprep.subr.bf16.mxu0 0
    %442 = vmatpush2.bf16.msra.mxu0 %v328
    %443 = vmatprep.subr.bf16.mxu0 0
    %444 = vmatpush2.bf16.msra.mxu0 %v327
    %445 = vmatprep.subr.bf16.mxu0 0
    %446 = vmatpush2.bf16.msra.mxu0 %v326
    %447 = vmatprep.subr.bf16.mxu0 0
    %448 = vmatpush2.bf16.msra.mxu0 %v325
    %449 = vmatprep.subr.bf16.mxu0 0
    %450 = vmatpush2.bf16.msra.mxu0 %v324
    %451 = vmatprep.subr.bf16.mxu0 0
    %452 = vmatpush2.bf16.msra.mxu0 %v323
    %453 = vmatprep.subr.bf16.mxu0 0
    %454 = vmatpush2.bf16.msra.mxu0 %v322
    %455 = vmatprep.subr.bf16.mxu0 0
    %456 = vmatpush2.bf16.msra.mxu0 %v321
    %457 = vmatprep.mubr.bf16.mxu0 %v138
    %458 = vmatmul.mubr.bf16.gmra.mxu0 %v137
    %v459 = vpop.f32.mrf.mxu0
    %v460 = vadd.f32 %v411, %v459
    %v461 = vpop.f32.mrf.mxu0
    %v462 = vpop.f32.mrf.mxu0
    %v463 = vadd.f32 %v414, %v462
    %v464 = vpop.f32.mrf.mxu0
    %465 = vmatprep.mubr.bf16.mxu0 %v143
    %466 = vmatmul.mubr.bf16.gmra.mxu0 %v142
    %v467 = vpop.f32.mrf.mxu0
    %v468 = vadd.f32 %v419, %v467
    %v469 = vpop.f32.mrf.mxu0
    %v470 = vpop.f32.mrf.mxu0
    %v471 = vadd.f32 %v422, %v470
    %v472 = vpop.f32.mrf.mxu0
    %473 = vdwg.mxu0
    %474 = vmatprep.subr.bf16.mxu0 0
    %475 = vmatpush1.bf16.msra.mxu0 0
    %476 = vmatprep.subr.bf16.mxu0 0
    %477 = vmatpush1.bf16.msra.mxu0 0
    %478 = vmatprep.subr.bf16.mxu0 0
    %479 = vmatpush1.bf16.msra.mxu0 0
    %480 = vmatprep.subr.bf16.mxu0 0
    %481 = vmatpush1.bf16.msra.mxu0 0
    %482 = vmatprep.subr.bf16.mxu0 0
    %483 = vmatpush1.bf16.msra.mxu0 %v332
    %484 = vmatprep.subr.bf16.mxu0 0
    %485 = vmatpush1.bf16.msra.mxu0 %v331
    %486 = vmatprep.subr.bf16.mxu0 0
    %487 = vmatpush1.bf16.msra.mxu0 %v330
    %488 = vmatprep.subr.bf16.mxu0 0
    %489 = vmatpush1.bf16.msra.mxu0 %v329
    %490 = vmatprep.subr.bf16.mxu0 0
    %491 = vmatpush2.bf16.msra.mxu0 0
    %492 = vmatprep.subr.bf16.mxu0 0
    %493 = vmatpush2.bf16.msra.mxu0 0
    %494 = vmatprep.subr.bf16.mxu0 0
    %495 = vmatpush2.bf16.msra.mxu0 0
    %496 = vmatprep.subr.bf16.mxu0 0
    %497 = vmatpush2.bf16.msra.mxu0 0
    %498 = vmatprep.subr.bf16.mxu0 0
    %499 = vmatpush2.bf16.msra.mxu0 0
    %500 = vmatprep.subr.bf16.mxu0 0
    %501 = vmatpush2.bf16.msra.mxu0 0
    %502 = vmatprep.subr.bf16.mxu0 0
    %503 = vmatpush2.bf16.msra.mxu0 0
    %504 = vmatprep.subr.bf16.mxu0 0
    %505 = vmatpush2.bf16.msra.mxu0 0
    %506 = vmatprep.mubr.bf16.mxu0 0
    %507 = vmatmul.mubr.bf16.gmra.mxu0 %v371
    %v508 = vpop.f32.mrf.mxu0
    %v509 = vadd.f32 %v460, %v508
    %v510 = vpop.f32.mrf.mxu0
    %v511 = vpop.f32.mrf.mxu0
    %v512 = vadd.f32 %v463, %v511
    %v513 = vpop.f32.mrf.mxu0
    %514 = vmatprep.mubr.bf16.mxu0 0
    %515 = vmatmul.mubr.bf16.gmra.mxu0 %v374
    %v516 = vpop.f32.mrf.mxu0
    %v517 = vadd.f32 %v468, %v516
    %v518 = vpop.f32.mrf.mxu0
    %v519 = vpop.f32.mrf.mxu0
    %v520 = vadd.f32 %v471, %v519
    %v521 = vpop.f32.mrf.mxu0
    %522 = vdwg.mxu0
    %v523 = vadd.f32 %v509, %v512
    %v524 = vadd.f32 %v523, %v517
    %v525 = vadd.f32 %v524, %v520
    %v526 = vrot.slane %v525, 4
    %v527 = vadd.f32 %v525, %v526
    %v528 = vrot.slane %v527, 2
    %v529 = vadd.f32 %v527, %v528
    %v530 = vrot.slane %v529, 1
    %v531 = vadd.f32 %v529, %v530
    %v532 = vrcp.pop 32.0
    %v533 = vmul.f32 %v531, %v532
    %v534 = vsub.f32 %v509, %v533
    %v535 = vsub.f32 %v512, %v533
    %v536 = vsub.f32 %v517, %v533
    %v537 = vsub.f32 %v520, %v533
    %v538 = vmul.f32 %v534, %v534
    %v539 = vmul.f32 %v535, %v535
    %v540 = vmul.f32 %v536, %v536
    %v541 = vmul.f32 %v537, %v537
    %v542 = vadd.f32 %v538, %v539
    %v543 = vadd.f32 %v542, %v540
    %v544 = vadd.f32 %v543, %v541
    %v545 = vrot.slane %v544, 4
    %v546 = vadd.f32 %v544, %v545
    %v547 = vrot.slane %v546, 2
    %v548 = vadd.f32 %v546, %v547
    %v549 = vrot.slane %v548, 1
    %v550 = vadd.f32 %v548, %v549
    %v551 = vmul.f32 %v550, %v532
    %v552 = vld [vmem:[%s2] sm:$0x1]
    %v553 = vadd.f32 %v551, 0.0001
    %v554 = vrsqrt.pop %v553
    %v555 = vmul.f32 %v552, %v554
    %v557 = vlaneseq
    %v558 = vshrl.u32 %v557, 7
    %v559 = vsub.s32 0, %v558
    %v560 = vrot.slane %v555, %v559
    %v562 = vmul.f32 %v534, %v560
    %v563 = vmul.f32 %v535, %v560
    %v564 = vmul.f32 %v536, %v560
    %v565 = vmul.f32 %v537, %v560
    %v566 = vld [vmem:[%s3] sm:$0x1]
    %v568 = vlaneseq
    %v569 = vshrl.u32 %v568, 7
    %v570 = vsub.s32 0, %v569
    %v571 = vrot.slane %v566, %v570
    %v573 = vadd.f32 %v562, %v571
    %v574 = vadd.f32 %v563, %v571
    %v575 = vadd.f32 %v564, %v571
    %v576 = vadd.f32 %v565, %v571
    %v577 = vmax.f32 %v573, 0.0
    %v578 = vmax.f32 %v574, 0.0
    %v579 = vmax.f32 %v575, 0.0
    %v580 = vmax.f32 %v576, 0.0
    %581 = vst [vmem:[#allocation2] sm:$0xff] %v577
    %582 = vst [vmem:[#allocation2 + $0x8] sm:$0xff] %v578
    %583 = vst [vmem:[#allocation2 + $0x10] sm:$0xff] %v579
    %584 = vst [vmem:[#allocation2 + $0x18] sm:$0xff] %v580
    // Predicated region
    $region18: #{patch_embed_forward.3} parent=1 // pred_check
      _
    $region19: #{patch_embed_forward.3} parent=1 // pred_check_branch
      %586 = sbr.rel (0) target = $region21
    $region20: #{patch_embed_forward.3} parent=1 // pred_region
      %s588 = ssub.s32 512, 512
      %589 = vsyncadd [#allocation3], %s588
      %s590 = sshll.u32 [#allocation2], 4
      %s591 = int_to_ptr.vmem [resolvable:$true] %s590
      %596 = dma.vmem_to_hbm [thread:$0]  %s591, 512, %s4, [#allocation3], 128, 128, 8
    $region21: #{patch_embed_forward.3} parent=1 // pred_fallthru
      _
    // Predicated region
    $region22: #{patch_embed_forward.3} parent=1 // pred_check
      _
    $region23: #{patch_embed_forward.3} parent=1 // pred_check_branch
      %598 = sbr.rel (0) target = $region25
    $region24: #{patch_embed_forward.3} parent=1 // pred_region
      %599 = dma.done [#allocation3], 512
    $region25: #{patch_embed_forward.3} parent=1 // pred_fallthru
      _
    %600 = vsyncpa [#allocation3], 1

</llo_original>
